<compile_context>
chip_gen: v5e
topology: v5e:2x2
jax: 0.10.0
libtpu: 0.0.40
codegen_flags: <defaults>
</compile_context>

<pallas_src>
import jax
import jax.numpy as jnp
from jax.experimental import pallas as pl
from jax.experimental.pallas import tpu as pltpu


def _choose_tile_rows(n: int, c: int) -> int:
    """Rows per tile: ~2 MiB (f32) per input tile, multiple of 32, capped at 1024."""
    budget_bytes = 2 * 1024 * 1024
    rows = budget_bytes // max(c * 4, 1)
    rows = max(32, min(1024, rows))
    rows -= rows % 32
    if n <= rows:
        # One tile covering the whole batch (block dim == full array dim is allowed).
        return n
    return rows


def _make_robust_loss_kernel(epsilon: float, n_total: int, n_cls: int, tn: int):
    eps = float(epsilon)
    one_minus_eps = 1.0 - eps
    smooth = eps / float(n_cls)
    needs_row_mask = (n_total % tn) != 0  # only the last tile can be partial

    def robust_loss_kernel(sfm_ref, logsfm_ref, tgt_ref, out_ref):
        i = pl.program_id(0)

        # Load native-dtype tiles and promote to f32 in-register (v5e has no bf16 VPU).
        sfm = sfm_ref[...].astype(jnp.float32)        # (TN, C)
        logsfm = logsfm_ref[...].astype(jnp.float32)  # (TN, C)
        tgt = tgt_ref[...]                            # (TN, 1) int32

        rows, cols = sfm.shape

        # target mask via iota compare -- no float one-hot materialized.
        cls_iota = jax.lax.broadcasted_iota(jnp.int32, (rows, cols), 1)
        is_tgt = cls_iota == tgt                      # (TN, C) bool

        # Numerically stable log_softmax over the class (lane) axis.
        row_max = jnp.max(sfm, axis=-1, keepdims=True)
        shifted = sfm - row_max
        lse = jnp.log(jnp.sum(jnp.exp(shifted), axis=-1, keepdims=True))
        log_preds = shifted - lse                     # (TN, C)

        # Fused per-element contribution (overall 0.5/N scale applied outside):
        #   -mask*(logsfm + (1-eps)*log_preds) - (eps/C)*log_preds
        contrib = (
            jnp.where(is_tgt, -(logsfm + one_minus_eps * log_preds), 0.0)
            - smooth * log_preds
        )

        if needs_row_mask:
            # Mask rows >= N of the (possibly OOB-padded) last tile. Use a select
            # so garbage/NaN in padded rows cannot leak into the sum.
            row_iota = jax.lax.broadcasted_iota(jnp.int32, (rows, cols), 0)
            valid = (i * rows + row_iota) < n_total
            contrib = jnp.where(valid, contrib, 0.0)

        tile_sum = jnp.sum(contrib)                   # scalar f32 partial for this tile

        # Lane-dense write of this tile's partial into its own output slab.
        out_ref[...] = jnp.full(out_ref.shape, tile_sum, dtype=jnp.float32)

    return robust_loss_kernel


def robust_loss(sfm, logsfm, target, epsilon=0.1):
    """Pallas equivalent of RobustLoss(epsilon).forward(sfm, logsfm, target)."""
    n, c = sfm.shape
    tgt2d = target.astype(jnp.int32).reshape(n, 1)

    tn = _choose_tile_rows(n, c)
    num_tiles = (n + tn - 1) // tn

    kernel = _make_robust_loss_kernel(epsilon, n, c, tn)

    grid_spec = pltpu.PrefetchScalarGridSpec(
        num_scalar_prefetch=0,
        grid=(num_tiles,),
        in_specs=[
            pl.BlockSpec((tn, c), lambda i: (i, 0)),   # sfm tile
            pl.BlockSpec((tn, c), lambda i: (i, 0)),   # logsfm tile
            pl.BlockSpec((tn, 1), lambda i: (i, 0)),   # target tile
        ],
        out_specs=pl.BlockSpec((1, 8, 128), lambda i: (i, 0, 0)),
    )

    bytes_accessed = int(
        sfm.size * sfm.dtype.itemsize
        + logsfm.size * logsfm.dtype.itemsize
        + tgt2d.size * 4
        + num_tiles * 8 * 128 * 4
    )
    cost = pl.CostEstimate(
        flops=10 * n * c,
        transcendentals=n * c + n,          # exp per element + log per row
        bytes_accessed=bytes_accessed,
    )

    partials = pl.pallas_call(
        kernel,
        out_shape=jax.ShapeDtypeStruct((num_tiles, 8, 128), jnp.float32),
        grid_spec=grid_spec,
        compiler_params=pltpu.CompilerParams(
            dimension_semantics=("parallel",),        # independent tiles -> megacore OK
            vmem_limit_bytes=32 * 1024 * 1024,
        ),
        cost_estimate=cost,
    )(sfm, logsfm, tgt2d)

    # Tiny final reduction + scale in plain JAX (num_tiles elements).
    return jnp.sum(partials[:, 0, 0]) * (0.5 / n)


def _reference(sfm, logsfm, target, epsilon=0.1):
    """Pure-JAX reference mirroring the PyTorch module."""
    n, c = sfm.shape
    onehot = jax.nn.one_hot(target, c, dtype=jnp.float32)
    nn_loss = jnp.mean(-jnp.sum(logsfm * onehot, axis=-1))
    log_preds = jax.nn.log_softmax(sfm, axis=-1)
    loss = jnp.mean(-jnp.sum(log_preds, axis=-1))
    nll = jnp.mean(-jnp.sum(log_preds * onehot, axis=-1))
    lce = (1.0 - epsilon) * nll + epsilon * (loss / c)
    return (nn_loss + lce) / 2.0


if __name__ == "__main__":
    # Small shapes consistent with the module: batch N=8, classes C=32.
    key = jax.random.PRNGKey(0)
    k1, k2 = jax.random.split(key)

    N, C = 8, 32
    logits = jax.random.normal(k1, (N, C), dtype=jnp.float32)
    sfm = jax.nn.softmax(logits, axis=-1)          # "sfm" input (pre-log-softmax preds)
    logsfm = jax.nn.log_softmax(logits, axis=-1)   # "logsfm" input (log-probs)
    target = jax.random.randint(k2, (N,), 0, C, dtype=jnp.int32)

    out = robust_loss(sfm, logsfm, target, epsilon=0.1)
    out = jax.block_until_ready(out)

    ref = _reference(sfm, logsfm, target, epsilon=0.1)
    assert jnp.allclose(out, ref, atol=1e-5, rtol=1e-5), (out, ref)

    # Also exercise a multi-tile / partial-last-tile path (masking + grid) once.
    N2, C2 = 100, 40
    logits2 = jax.random.normal(k1, (N2, C2), dtype=jnp.float32)
    sfm2 = jax.nn.softmax(logits2, axis=-1)
    logsfm2 = jax.nn.log_softmax(logits2, axis=-1)
    tgt2 = jax.random.randint(k2, (N2,), 0, C2, dtype=jnp.int32)
    out2 = jax.block_until_ready(robust_loss(sfm2, logsfm2, tgt2, epsilon=0.1))
    ref2 = _reference(sfm2, logsfm2, tgt2, epsilon=0.1)
    assert jnp.allclose(out2, ref2, atol=1e-5, rtol=1e-5), (out2, ref2)

    print("KERNEL_OK")
</pallas_src>

<mosaic_0001>
module attributes {stable_mosaic.version = 11 : i64} {
  func.func @robust_loss_kernel(%arg0: i32, %arg1: memref<8x32xf32, #tpu.memory_space<vmem>>, %arg2: memref<8x32xf32, #tpu.memory_space<vmem>>, %arg3: memref<8x1xi32, #tpu.memory_space<vmem>>, %arg4: memref<1x8x128xf32, #tpu.memory_space<vmem>>) attributes {dimension_semantics = [#tpu.dimension_semantics<parallel>], iteration_bounds = array<i64: 1>, scalar_prefetch = 0 : i64, scratch_operands = 0 : i64, tpu.core_type = #tpu.core_type<tc>, window_params = [{transform_indices = @transform_0, window_bounds = array<i64: 8, 32>}, {transform_indices = @transform_1, window_bounds = array<i64: 8, 32>}, {transform_indices = @transform_2, window_bounds = array<i64: 8, 1>}, {transform_indices = @transform_3, window_bounds = array<i64: 1, 8, 128>}]} {
    %c0 = arith.constant 0 : index
    %c0_0 = arith.constant 0 : index
    %0 = vector.load %arg1[%c0, %c0_0] : memref<8x32xf32, #tpu.memory_space<vmem>>, vector<8x32xf32>
    %c0_1 = arith.constant 0 : index
    %c0_2 = arith.constant 0 : index
    %1 = vector.load %arg2[%c0_1, %c0_2] : memref<8x32xf32, #tpu.memory_space<vmem>>, vector<8x32xf32>
    %c0_3 = arith.constant 0 : index
    %c0_4 = arith.constant 0 : index
    %2 = vector.load %arg3[%c0_3, %c0_4] : memref<8x1xi32, #tpu.memory_space<vmem>>, vector<8x1xi32>
    %3 = tpu.iota {dimensions = array<i32: 1>} : vector<8x32xi32>
    %4 = vector.broadcast %2 : vector<8x1xi32> to vector<8x32xi32>
    %5 = arith.cmpi eq, %3, %4 : vector<8x32xi32>
    %cst = arith.constant dense<0xFF800000> : vector<8xf32>
    %6 = vector.multi_reduction <maximumf>, %0, %cst [1] : vector<8x32xf32> to vector<8xf32>
    %7 = vector.shape_cast %6 : vector<8xf32> to vector<8x1xf32>
    %8 = vector.broadcast %7 : vector<8x1xf32> to vector<8x32xf32>
    %9 = arith.subf %0, %8 : vector<8x32xf32>
    %10 = math.exp %9 : vector<8x32xf32>
    %cst_5 = arith.constant dense<0.000000e+00> : vector<8xf32>
    %11 = vector.multi_reduction <add>, %10, %cst_5 [1] : vector<8x32xf32> to vector<8xf32>
    %12 = vector.shape_cast %11 : vector<8xf32> to vector<8x1xf32>
    %13 = math.log %12 : vector<8x1xf32>
    %14 = vector.broadcast %13 : vector<8x1xf32> to vector<8x32xf32>
    %15 = arith.subf %9, %14 : vector<8x32xf32>
    %cst_6 = arith.constant 0.899999976 : f32
    %16 = vector.broadcast %cst_6 : f32 to vector<8x32xf32>
    %17 = arith.mulf %16, %15 : vector<8x32xf32>
    %18 = arith.addf %1, %17 : vector<8x32xf32>
    %cst_7 = arith.constant 0.000000e+00 : f32
    %19 = vector.broadcast %cst_7 : f32 to vector<8x32xf32>
    %20 = arith.subf %19, %18 : vector<8x32xf32>
    %cst_8 = arith.constant 0.000000e+00 : f32
    %21 = vector.broadcast %cst_8 : f32 to vector<8x32xf32>
    %22 = arith.select %5, %20, %21 : vector<8x32xi1>, vector<8x32xf32>
    %cst_9 = arith.constant 3.125000e-03 : f32
    %23 = vector.broadcast %cst_9 : f32 to vector<8x32xf32>
    %24 = arith.mulf %23, %15 : vector<8x32xf32>
    %25 = arith.subf %22, %24 : vector<8x32xf32>
    %26 = vector.shape_cast %25 : vector<8x32xf32> to vector<1x8x32xf32>
    %cst_10 = arith.constant dense<0.000000e+00> : vector<1xf32>
    %27 = vector.multi_reduction <add>, %26, %cst_10 [1, 2] : vector<1x8x32xf32> to vector<1xf32>
    %28 = vector.shape_cast %27 : vector<1xf32> to vector<1x1x1xf32>
    %29 = vector.extract %28[0, 0, 0] : f32 from vector<1x1x1xf32>
    %30 = vector.broadcast %29 : f32 to vector<1x8x128xf32>
    %c0_11 = arith.constant 0 : index
    %c0_12 = arith.constant 0 : index
    %c0_13 = arith.constant 0 : index
    %31 = vector.load %arg4[%c0_11, %c0_12, %c0_13] : memref<1x8x128xf32, #tpu.memory_space<vmem>>, vector<1x8x128xf32>
    tpu.vector_store %arg4[%c0_11, %c0_12, %c0_13], %30 {strides = array<i32>} : memref<1x8x128xf32, #tpu.memory_space<vmem>>, vector<1x8x128xf32>,
    return
  }
  func.func @transform_0(%arg0: i32) -> (i32, i32) {
    %c0_i32 = arith.constant 0 : i32
    %c0_i32_0 = arith.constant 0 : i32
    return %arg0, %c0_i32 : i32, i32
  }
  func.func @transform_1(%arg0: i32) -> (i32, i32) {
    %c0_i32 = arith.constant 0 : i32
    %c0_i32_0 = arith.constant 0 : i32
    return %arg0, %c0_i32 : i32, i32
  }
  func.func @transform_2(%arg0: i32) -> (i32, i32) {
    %c0_i32 = arith.constant 0 : i32
    %c0_i32_0 = arith.constant 0 : i32
    return %arg0, %c0_i32 : i32, i32
  }
  func.func @transform_3(%arg0: i32) -> (i32, i32, i32) {
    %c0_i32 = arith.constant 0 : i32
    %c0_i32_0 = arith.constant 0 : i32
    %c0_i32_1 = arith.constant 0 : i32
    return %arg0, %c0_i32, %c0_i32_0 : i32, i32, i32
  }
}

</mosaic_0001>

<llo_original>
// kernel: tpu_custom_call.1
$region0: #{tpu_custom_call.1}
  #allocation0 [shape = 'u32[]', space=smem, size = 0x4, offset = 0x4, fixed_abs, tag = 'smem constant byte address 0x4 - core index']
  #allocation1 [shape = 'u32[72,128]{1,0:T(1,128)}', space=vmem, size = 0x9000, scoped, tag = 'internal scratch']
  %s0 = inlined_call_operand.vmem [shape: f32[8,32], index: 0, kind: input, shape index: {}]
  %s1 = inlined_call_operand.hbm [shape: f32[8,32], index: 1, kind: input, shape index: {}]
  %s2 = inlined_call_operand.vmem [shape: s32[8,1], index: 2, kind: input, shape index: {}]
  %s3 = inlined_call_operand.hbm [shape: f32[1,8,128], index: 3, kind: output, shape index: {}]
  %s4 = sld [smem:[#allocation0]]
  $region26: #{tpu_custom_call.1} parent=0
    _
  %s6 = ssub.s32 1, %s4
  %s7 = scalar_select 0, %s6, %s4
  $region1: #{tpu_custom_call.1} parent=0
    #allocation2 [shape = 'u8[4096]{0}', space=vmem, size = 0x1000, scoped, tag = 'input window, operand 1, single buffered']
    #allocation3 [shape = 's32[1]{0}', space=sflag, size = 0x4, scoped, tag = 'scoped memory for tpu_custom_call.1']
    #allocation4 [shape = 's32[1]{0}', space=sflag, size = 0x4, scoped, tag = 'scoped memory for tpu_custom_call.1']
    #allocation5 [shape = 'u8[4096]{0}', space=vmem, size = 0x1000, scoped, tag = 'output window, operand 0, single buffered']
    %8 = vsyncpa [#allocation3], 0
    %9 = vsyncpa [#allocation4], 0
    // Predicated region
    $region2: #{tpu_custom_call.1} parent=1 // pred_check
      _
    $region3: #{tpu_custom_call.1} parent=1 // pred_check_branch
      %11 = sbr.rel (0) target = $region5
    $region4: #{tpu_custom_call.1} parent=1 // pred_region
      _
    $region5: #{tpu_custom_call.1} parent=1 // pred_fallthru
      _
    // Predicated region
    $region6: #{tpu_custom_call.1} parent=1 // pred_check
      _
    $region7: #{tpu_custom_call.1} parent=1 // pred_check_branch
      %13 = sbr.rel (0) target = $region9
    $region8: #{tpu_custom_call.1} parent=1 // pred_region
      %15 = vsyncadd [#allocation3], 0
      %s17 = sshll.u32 %s1, 4
      %s18 = int_to_ptr.hbm [resolvable:$true] %s17
      %s19 = sshll.u32 [#allocation2], 4
      %s20 = int_to_ptr.vmem [resolvable:$true] %s19
      %22 = dma.hbm_to_vmem [thread:$0]  %s18, 128, %s20, [#allocation3]
    $region9: #{tpu_custom_call.1} parent=1 // pred_fallthru
      _
    // Predicated region
    $region10: #{tpu_custom_call.1} parent=1 // pred_check
      _
    $region11: #{tpu_custom_call.1} parent=1 // pred_check_branch
      %24 = sbr.rel (0) target = $region13
    $region12: #{tpu_custom_call.1} parent=1 // pred_region
      _
    $region13: #{tpu_custom_call.1} parent=1 // pred_fallthru
      _
    // Predicated region
    $region14: #{tpu_custom_call.1} parent=1 // pred_check
      _
    $region15: #{tpu_custom_call.1} parent=1 // pred_check_branch
      %26 = sbr.rel (0) target = $region17
    $region16: #{tpu_custom_call.1} parent=1 // pred_region
      %28 = dma.done [#allocation3], 128
    $region17: #{tpu_custom_call.1} parent=1 // pred_fallthru
      _
    %v29 = vld [vmem:[%s0] sm:$0xff]
    %v30 = vld [vmem:[#allocation2] sm:$0xff]
    %v31 = vld [vmem:[%s2] sm:$0xff]
    %v32 = vlaneseq
    %v33 = vand.u32 %v32, 127
    %34 = vset.pattern.permute.xlu0 0
    %35 = vperm.xlu0 %34, %v31
    %v36 = vpop.permute.xlu0 %35
    %vm37 = vcmp.eq.s32.totalorder %v33, %v36
    %vm38 = vcmask 261120
    %v39 = vsel %vm38, %v29, -inf
    %40 = vmax.xlane.f32.xlu0 %v39
    %v41 = vpop.xlane.xlu0 %40
    %v42 = vsub.f32 %v29, %v41
    %v43 = vmul.f32 %v42, 1.442695
    %v44 = vpow.pop %v43
    %v45 = vsel %vm38, %v44, 0.0
    %46 = vadd.xlane.f32.xlu0 %v45
    %v47 = vpop.xlane.xlu0 %46
    %v48 = vlog2.pop %v47
    %v49 = vmul.f32 %v48, 0.6931472
    %v50 = vsub.f32 %v42, %v49
    %v51 = vmul.f32 %v50, 0.9
    %v52 = vadd.f32 %v30, %v51
    %v53 = vsub.f32 0.0, %v52
    %v54 = vsel %vm37, %v53, 0.0
    %v55 = vmul.f32 %v50, 0.003125
    %v56 = vsub.f32 %v54, %v55
    %v57 = vsel %vm38, %v56, 0.0
    %58 = vadd.xlane.f32.xlu0 %v57
    %v59 = vpop.xlane.xlu0 %58
    %v60 = vrot.slane %v59, 4
    %v61 = vadd.f32 %v59, %v60
    %v62 = vrot.slane %v61, 2
    %v63 = vadd.f32 %v61, %v62
    %v64 = vrot.slane %v63, 1
    %v65 = vadd.f32 %v63, %v64
    %s66 = vtos %v65
    %v67 = vstv %s66
    %68 = vst [vmem:[#allocation5] sm:$0xff] %v67
    // Predicated region
    $region18: #{tpu_custom_call.1} parent=1 // pred_check
      _
    $region19: #{tpu_custom_call.1} parent=1 // pred_check_branch
      %70 = sbr.rel (0) target = $region21
    $region20: #{tpu_custom_call.1} parent=1 // pred_region
      %72 = vsyncadd [#allocation4], 0
      %s74 = sshll.u32 [#allocation5], 4
      %s75 = int_to_ptr.vmem [resolvable:$true] %s74
      %s76 = sshll.u32 %s3, 4
      %s77 = int_to_ptr.hbm [resolvable:$true] %s76
      %79 = dma.vmem_to_hbm [thread:$0]  %s75, 128, %s77, [#allocation4]
    $region21: #{tpu_custom_call.1} parent=1 // pred_fallthru
      _
    // Predicated region
    $region22: #{tpu_custom_call.1} parent=1 // pred_check
      _
    $region23: #{tpu_custom_call.1} parent=1 // pred_check_branch
      %81 = sbr.rel (0) target = $region25
    $region24: #{tpu_custom_call.1} parent=1 // pred_region
      %83 = dma.done [#allocation4], 128
    $region25: #{tpu_custom_call.1} parent=1 // pred_fallthru
      _
    %84 = vsyncpa [#allocation3], 1
    %85 = vsyncpa [#allocation4], 1

</llo_original>
